<compile_context>
chip_gen: v5e
topology: v5e:2x2
jax: 0.10.0
libtpu: 0.0.40
codegen_flags: <defaults>
</compile_context>

<pallas_src>
import math
from functools import partial
from typing import Any, NamedTuple

import jax
import jax.numpy as jnp
from jax.experimental import pallas as pl
from jax.experimental.pallas import tpu as pltpu

K_PAD = 8      # padded input-feature dim (real input_dims = 5)
N_PAD = 128    # padded action dim (real n_actions = 7), lane-dense output


class ActorParams(NamedTuple):
    w1: jax.Array          # (K_PAD, fc1)  bf16, 1/norm folded in
    b1: jax.Array          # (1, fc1)      act_dtype
    w2: jax.Array          # (fc1, fc2)    bf16
    b2: jax.Array          # (1, fc2)      act_dtype
    w3: jax.Array          # (fc2, N_PAD)  bf16, padded action columns zero
    b3: jax.Array          # (1, N_PAD)    f32, padded lanes -1e30
    in_dims: int
    n_actions: int
    act_dtype: Any


def pick_act_dtype():
    """bf16 elementwise path on chips with a bf16 VPU (v6e/v7x); f32 otherwise."""
    try:
        kind = jax.devices()[0].device_kind.lower()
    except Exception:
        return jnp.bfloat16
    if any(v in kind for v in ("v2", "v3", "v4", "v5")):
        return jnp.float32
    return jnp.bfloat16


def prepare_actor_params(norm, params, act_dtype=jnp.bfloat16):
    """One-time host-side prep: fold norm into W1, pad, cast. Call once, reuse."""
    w1, b1, w2, b2, w3, b3 = params
    in_dims, fc1 = w1.shape
    fc2 = w2.shape[1]
    n_actions = w3.shape[1]

    inv_norm = (1.0 / norm).astype(jnp.float32)
    w1_folded = inv_norm[:, None] * w1                                   # fold x/norm into W1
    w1_p = (jnp.zeros((K_PAD, fc1), jnp.float32)
            .at[:in_dims].set(w1_folded).astype(jnp.bfloat16))
    w3_p = (jnp.zeros((fc2, N_PAD), jnp.float32)
            .at[:, :n_actions].set(w3).astype(jnp.bfloat16))
    # Padded softmax lanes: zero weights + -1e30 bias -> exp(logit - max) == 0.
    b3_p = jnp.full((1, N_PAD), -1e30, jnp.float32).at[:, :n_actions].set(b3)

    return ActorParams(
        w1=w1_p, b1=b1.astype(act_dtype),
        w2=w2.astype(jnp.bfloat16), b2=b2.astype(act_dtype),
        w3=w3_p, b3=b3_p,
        in_dims=in_dims, n_actions=n_actions, act_dtype=act_dtype)


def actor_kernel(x_ref, w1_ref, b1_ref, w2_ref, b2_ref, w3_ref, b3_ref, out_ref,
                 *, act_dtype):
    x = x_ref[...]                                                       # (tile, 8) bf16

    # Layer 1: bf16 x bf16 on the MXU, f32 accumulate, act_dtype elementwise.
    a1 = jnp.dot(x, w1_ref[...], preferred_element_type=jnp.float32)
    h1 = jnp.maximum(a1.astype(act_dtype) + b1_ref[...], 0.0).astype(jnp.bfloat16)

    # Layer 2: Linear(256 -> 256) + ReLU.
    a2 = jnp.dot(h1, w2_ref[...], preferred_element_type=jnp.float32)
    h2 = jnp.maximum(a2.astype(act_dtype) + b2_ref[...], 0.0).astype(jnp.bfloat16)

    # Layer 3: Linear(256 -> N_PAD) + Softmax(dim=-1) in f32, exact reciprocal.
    logits = jnp.dot(h2, w3_ref[...], preferred_element_type=jnp.float32) + b3_ref[...]
    m = jnp.max(logits, axis=-1, keepdims=True)
    e = jnp.exp(logits - m)
    denom = jnp.sum(e, axis=-1, keepdims=True)
    out_ref[...] = (e / denom).astype(out_ref.dtype)                    # bf16 store


def _round_up(x, m):
    return -(-x // m) * m


def actor_forward(state, prepped: ActorParams, *, tile_b=512):
    """Full actor MLP in one Pallas call; returns f32 softmax probs (batch, n_actions)."""
    batch = state.shape[0]
    fc1 = prepped.w1.shape[1]
    fc2 = prepped.w2.shape[1]

    # ---- batch padding / tiling ----
    # Aim for >=2 grid steps so the "parallel" batch axis can shard across
    # v7x's two TensorCores (harmless no-op on single-TC v5e/v6e).
    b_pad = max(8, _round_up(batch, 8))
    if b_pad <= tile_b:
        if b_pad >= 16:
            tile = _round_up(-(-b_pad // 2), 8)
            b_pad = 2 * tile
        else:
            tile = b_pad                       # too small to split below 8 sublanes
    else:
        tile = tile_b
        b_pad = _round_up(b_pad, tile)

    x = jnp.zeros((b_pad, K_PAD), jnp.bfloat16)
    x = x.at[:batch, :prepped.in_dims].set(state.astype(jnp.bfloat16))

    grid = (b_pad // tile,)
    out = pl.pallas_call(
        partial(actor_kernel, act_dtype=prepped.act_dtype),
        out_shape=jax.ShapeDtypeStruct((b_pad, N_PAD), jnp.bfloat16),
        grid=grid,
        in_specs=[
            pl.BlockSpec((tile, K_PAD), lambda i: (i, 0)),    # activations: tiled over batch
            pl.BlockSpec((K_PAD, fc1), lambda i: (0, 0)),     # weights/biases: constant
            pl.BlockSpec((1, fc1), lambda i: (0, 0)),         #   index_map -> stay resident
            pl.BlockSpec((fc1, fc2), lambda i: (0, 0)),
            pl.BlockSpec((1, fc2), lambda i: (0, 0)),
            pl.BlockSpec((fc2, N_PAD), lambda i: (0, 0)),
            pl.BlockSpec((1, N_PAD), lambda i: (0, 0)),
        ],
        out_specs=pl.BlockSpec((tile, N_PAD), lambda i: (i, 0)),
        compiler_params=pltpu.CompilerParams(
            dimension_semantics=("parallel",)),
    )(x, prepped.w1, prepped.b1, prepped.w2, prepped.b2, prepped.w3, prepped.b3)

    # Slice off padded batch rows / action lanes, return f32 probabilities.
    return out[:batch, :prepped.n_actions].astype(jnp.float32)


def init_linear_params(key, fan_in, fan_out):
    """Deterministic init mimicking torch.nn.Linear default (uniform +-1/sqrt(fan_in))."""
    kw, kb = jax.random.split(key)
    bound = 1.0 / math.sqrt(fan_in)
    w = jax.random.uniform(kw, (fan_in, fan_out), jnp.float32, -bound, bound)
    b = jax.random.uniform(kb, (1, fan_out), jnp.float32, -bound, bound)
    return w, b


if __name__ == "__main__":
    # --- module hyper-parameters (as implied by __init__ / forward) ---
    settings = {
        "time": {"duration": 1.0, "step_size": 10.0},
        "instrument": {"ffor": 60.0},
    }
    n_sats = 4
    n_actions = 7
    input_dims = 5          # forward() builds a 5-element normalization vector
    fc1_dims = 256
    fc2_dims = 256

    # Normalization constants exactly as in forward():
    norm = jnp.array(
        [
            86400.0 * settings["time"]["duration"] / settings["time"]["step_size"],
            settings["instrument"]["ffor"] / 2.0,
            180.0,
            180.0,
            float(n_sats),
        ],
        dtype=jnp.float32,
    )

    # --- deterministic parameter init ---
    key = jax.random.PRNGKey(0)
    k1, k2, k3, kx = jax.random.split(key, 4)
    w1, b1 = init_linear_params(k1, input_dims, fc1_dims)
    w2, b2 = init_linear_params(k2, fc1_dims, fc2_dims)
    w3, b3 = init_linear_params(k3, fc2_dims, n_actions)
    params = (w1, b1, w2, b2, w3, b3)

    # One-time parameter prep (fold / pad / cast), reused across every env step.
    act_dtype = pick_act_dtype()
    prepped = prepare_actor_params(norm, params, act_dtype=act_dtype)

    # --- example input: a small batch of raw (un-normalized) states ---
    batch = 8
    state = jax.random.uniform(kx, (batch, input_dims), jnp.float32) * norm

    # Jitted per-step forward: the only traced input is the state.
    fwd = jax.jit(lambda s: actor_forward(s, prepped))
    probs = jax.block_until_ready(fwd(state))

    # Reference (pure JAX, f32) for a sanity check of the forward-pass semantics.
    # TODO(synk): torch.distributions.Categorical wrapper (sampling / log_prob)
    # has no kernel equivalent; downstream code consumes the probabilities.
    xr = state / norm
    h1r = jnp.maximum(xr @ w1 + b1, 0.0)
    h2r = jnp.maximum(h1r @ w2 + b2, 0.0)
    ref = jax.nn.softmax(h2r @ w3 + b3, axis=-1)

    row_sums = jnp.sum(probs, axis=-1)
    assert probs.shape == (batch, n_actions)
    assert bool(jnp.all(jnp.abs(row_sums - 1.0) < 1e-2))      # bf16 output quantization only
    assert bool(jnp.max(jnp.abs(probs - ref)) < 5e-2)         # bf16 weight/activation path

    print("KERNEL_OK")
</pallas_src>

<mosaic_0001>
module attributes {stable_mosaic.version = 11 : i64} {
  func.func @actor_kernel(%arg0: i32, %arg1: memref<8x8xbf16, #tpu.memory_space<vmem>>, %arg2: memref<8x256xbf16, #tpu.memory_space<vmem>>, %arg3: memref<1x256xbf16, #tpu.memory_space<vmem>>, %arg4: memref<256x256xbf16, #tpu.memory_space<vmem>>, %arg5: memref<1x256xbf16, #tpu.memory_space<vmem>>, %arg6: memref<256x128xbf16, #tpu.memory_space<vmem>>, %arg7: memref<1x128xf32, #tpu.memory_space<vmem>>, %arg8: memref<8x128xbf16, #tpu.memory_space<vmem>>) attributes {dimension_semantics = [#tpu.dimension_semantics<parallel>], iteration_bounds = array<i64: 1>, scalar_prefetch = 0 : i64, scratch_operands = 0 : i64, tpu.core_type = #tpu.core_type<tc>, window_params = [{transform_indices = @transform_0, window_bounds = array<i64: 8, 8>}, {pipeline_mode = #tpu.pipeline_mode<synchronous>, transform_indices = @transform_1, window_bounds = array<i64: 8, 256>}, {pipeline_mode = #tpu.pipeline_mode<synchronous>, transform_indices = @transform_2, window_bounds = array<i64: 1, 256>}, {pipeline_mode = #tpu.pipeline_mode<synchronous>, transform_indices = @transform_3, window_bounds = array<i64: 256, 256>}, {pipeline_mode = #tpu.pipeline_mode<synchronous>, transform_indices = @transform_4, window_bounds = array<i64: 1, 256>}, {pipeline_mode = #tpu.pipeline_mode<synchronous>, transform_indices = @transform_5, window_bounds = array<i64: 256, 128>}, {pipeline_mode = #tpu.pipeline_mode<synchronous>, transform_indices = @transform_6, window_bounds = array<i64: 1, 128>}, {transform_indices = @transform_7, window_bounds = array<i64: 8, 128>}]} {
    %c0 = arith.constant 0 : index
    %c0_0 = arith.constant 0 : index
    %0 = vector.load %arg1[%c0, %c0_0] : memref<8x8xbf16, #tpu.memory_space<vmem>>, vector<8x8xbf16>
    %c0_1 = arith.constant 0 : index
    %c0_2 = arith.constant 0 : index
    %1 = vector.load %arg2[%c0_1, %c0_2] : memref<8x256xbf16, #tpu.memory_space<vmem>>, vector<8x256xbf16>
    %cst = arith.constant dense<0.000000e+00> : vector<8x256xf32>
    %2 = tpu.matmul %0, %1, %cst {dimension_numbers = #tpu.dot_dimension_numbers<[1], [0], [0], [1], [0, 0, 1, 1], [], []>} : vector<8x8xbf16>, vector<8x256xbf16>, vector<8x256xf32> -> vector<8x256xf32>
    %3 = arith.truncf %2 : vector<8x256xf32> to vector<8x256xbf16>
    %c0_3 = arith.constant 0 : index
    %c0_4 = arith.constant 0 : index
    %4 = vector.load %arg3[%c0_3, %c0_4] : memref<1x256xbf16, #tpu.memory_space<vmem>>, vector<1x256xbf16>
    %5 = vector.broadcast %4 : vector<1x256xbf16> to vector<8x256xbf16>
    %6 = arith.addf %3, %5 : vector<8x256xbf16>
    %cst_5 = arith.constant 0.000000e+00 : bf16
    %7 = vector.broadcast %cst_5 : bf16 to vector<8x256xbf16>
    %8 = arith.maximumf %6, %7 : vector<8x256xbf16>
    %c0_6 = arith.constant 0 : index
    %c0_7 = arith.constant 0 : index
    %9 = vector.load %arg4[%c0_6, %c0_7] : memref<256x256xbf16, #tpu.memory_space<vmem>>, vector<256x256xbf16>
    %cst_8 = arith.constant dense<0.000000e+00> : vector<8x256xf32>
    %10 = tpu.matmul %8, %9, %cst_8 {dimension_numbers = #tpu.dot_dimension_numbers<[1], [0], [0], [1], [0, 0, 1, 1], [], []>} : vector<8x256xbf16>, vector<256x256xbf16>, vector<8x256xf32> -> vector<8x256xf32>
    %11 = arith.truncf %10 : vector<8x256xf32> to vector<8x256xbf16>
    %c0_9 = arith.constant 0 : index
    %c0_10 = arith.constant 0 : index
    %12 = vector.load %arg5[%c0_9, %c0_10] : memref<1x256xbf16, #tpu.memory_space<vmem>>, vector<1x256xbf16>
    %13 = vector.broadcast %12 : vector<1x256xbf16> to vector<8x256xbf16>
    %14 = arith.addf %11, %13 : vector<8x256xbf16>
    %cst_11 = arith.constant 0.000000e+00 : bf16
    %15 = vector.broadcast %cst_11 : bf16 to vector<8x256xbf16>
    %16 = arith.maximumf %14, %15 : vector<8x256xbf16>
    %c0_12 = arith.constant 0 : index
    %c0_13 = arith.constant 0 : index
    %17 = vector.load %arg6[%c0_12, %c0_13] : memref<256x128xbf16, #tpu.memory_space<vmem>>, vector<256x128xbf16>
    %cst_14 = arith.constant dense<0.000000e+00> : vector<8x128xf32>
    %18 = tpu.matmul %16, %17, %cst_14 {dimension_numbers = #tpu.dot_dimension_numbers<[1], [0], [0], [1], [0, 0, 1, 1], [], []>} : vector<8x256xbf16>, vector<256x128xbf16>, vector<8x128xf32> -> vector<8x128xf32>
    %c0_15 = arith.constant 0 : index
    %c0_16 = arith.constant 0 : index
    %19 = vector.load %arg7[%c0_15, %c0_16] : memref<1x128xf32, #tpu.memory_space<vmem>>, vector<1x128xf32>
    %20 = vector.broadcast %19 : vector<1x128xf32> to vector<8x128xf32>
    %21 = arith.addf %18, %20 : vector<8x128xf32>
    %cst_17 = arith.constant dense<0xFF800000> : vector<8xf32>
    %22 = vector.multi_reduction <maximumf>, %21, %cst_17 [1] : vector<8x128xf32> to vector<8xf32>
    %23 = vector.shape_cast %22 : vector<8xf32> to vector<8x1xf32>
    %24 = vector.broadcast %23 : vector<8x1xf32> to vector<8x128xf32>
    %25 = arith.subf %21, %24 : vector<8x128xf32>
    %26 = math.exp %25 : vector<8x128xf32>
    %cst_18 = arith.constant dense<0.000000e+00> : vector<8xf32>
    %27 = vector.multi_reduction <add>, %26, %cst_18 [1] : vector<8x128xf32> to vector<8xf32>
    %28 = vector.shape_cast %27 : vector<8xf32> to vector<8x1xf32>
    %29 = vector.broadcast %28 : vector<8x1xf32> to vector<8x128xf32>
    %30 = arith.divf %26, %29 : vector<8x128xf32>
    %31 = arith.truncf %30 : vector<8x128xf32> to vector<8x128xbf16>
    %c0_19 = arith.constant 0 : index
    %c0_20 = arith.constant 0 : index
    %32 = vector.load %arg8[%c0_19, %c0_20] : memref<8x128xbf16, #tpu.memory_space<vmem>>, vector<8x128xbf16>
    tpu.vector_store %arg8[%c0_19, %c0_20], %31 {strides = array<i32>} : memref<8x128xbf16, #tpu.memory_space<vmem>>, vector<8x128xbf16>,
    return
  }
  func.func @transform_0(%arg0: i32) -> (i32, i32) {
    %c0_i32 = arith.constant 0 : i32
    %c0_i32_0 = arith.constant 0 : i32
    return %arg0, %c0_i32 : i32, i32
  }
  func.func @transform_1(%arg0: i32) -> (i32, i32) {
    %c0_i32 = arith.constant 0 : i32
    %c0_i32_0 = arith.constant 0 : i32
    %c0_i32_1 = arith.constant 0 : i32
    return %c0_i32, %c0_i32_0 : i32, i32
  }
  func.func @transform_2(%arg0: i32) -> (i32, i32) {
    %c0_i32 = arith.constant 0 : i32
    %c0_i32_0 = arith.constant 0 : i32
    %c0_i32_1 = arith.constant 0 : i32
    return %c0_i32, %c0_i32_0 : i32, i32
  }
  func.func @transform_3(%arg0: i32) -> (i32, i32) {
    %c0_i32 = arith.constant 0 : i32
    %c0_i32_0 = arith.constant 0 : i32
    %c0_i32_1 = arith.constant 0 : i32
    return %c0_i32, %c0_i32_0 : i32, i32
  }
  func.func @transform_4(%arg0: i32) -> (i32, i32) {
    %c0_i32 = arith.constant 0 : i32
    %c0_i32_0 = arith.constant 0 : i32
    %c0_i32_1 = arith.constant 0 : i32
    return %c0_i32, %c0_i32_0 : i32, i32
  }
  func.func @transform_5(%arg0: i32) -> (i32, i32) {
    %c0_i32 = arith.constant 0 : i32
    %c0_i32_0 = arith.constant 0 : i32
    %c0_i32_1 = arith.constant 0 : i32
    return %c0_i32, %c0_i32_0 : i32, i32
  }
  func.func @transform_6(%arg0: i32) -> (i32, i32) {
    %c0_i32 = arith.constant 0 : i32
    %c0_i32_0 = arith.constant 0 : i32
    %c0_i32_1 = arith.constant 0 : i32
    return %c0_i32, %c0_i32_0 : i32, i32
  }
  func.func @transform_7(%arg0: i32) -> (i32, i32) {
    %c0_i32 = arith.constant 0 : i32
    %c0_i32_0 = arith.constant 0 : i32
    return %arg0, %c0_i32 : i32, i32
  }
}

</mosaic_0001>

<llo_original>
// kernel: _lambda_.1
$region0: #{_lambda_.1}
  #allocation0 [shape = 'u32[]', space=smem, size = 0x4, offset = 0x4, fixed_abs, tag = 'smem constant byte address 0x4 - core index']
  #allocation1 [shape = 'u32[72,128]{1,0:T(1,128)}', space=vmem, size = 0x9000, scoped, tag = 'internal scratch']
  %s0 = inlined_call_operand.vmem [shape: bf16[8,8], index: 0, kind: input, shape index: {}]
  %s1 = inlined_call_operand.vmem [shape: bf16[8,256], index: 1, kind: input, shape index: {}]
  %s2 = inlined_call_operand.vmem [shape: bf16[1,256], index: 2, kind: input, shape index: {}]
  %s3 = inlined_call_operand.hbm [shape: bf16[256,256], index: 3, kind: input, shape index: {}]
  %s4 = inlined_call_operand.vmem [shape: bf16[1,256], index: 4, kind: input, shape index: {}]
  %s5 = inlined_call_operand.hbm [shape: bf16[256,128], index: 5, kind: input, shape index: {}]
  %s6 = inlined_call_operand.vmem [shape: f32[1,128], index: 6, kind: input, shape index: {}]
  %s7 = inlined_call_operand.vmem [shape: bf16[8,128], index: 7, kind: output, shape index: {}]
  %s8 = sld [smem:[#allocation0]]
  $region46: #{_lambda_.1} parent=0
    _
  %s10 = ssub.s32 1, %s8
  %s11 = scalar_select 0, %s10, %s8
  $region1: #{_lambda_.1} parent=0
    #allocation2 [shape = 'u8[131072]{0}', space=vmem, size = 0x20000, scoped, tag = 'input window, operand 3, single buffered']
    #allocation3 [shape = 's32[1]{0}', space=sflag, size = 0x4, scoped, tag = 'scoped memory for _lambda_.1']
    #allocation4 [shape = 'u8[65536]{0}', space=vmem, size = 0x10000, scoped, tag = 'input window, operand 5, single buffered']
    #allocation5 [shape = 's32[1]{0}', space=sflag, size = 0x4, scoped, tag = 'scoped memory for _lambda_.1']
    %12 = vsyncpa [#allocation3], 0
    %13 = vsyncpa [#allocation5], 0
    // Predicated region
    $region2: #{_lambda_.1} parent=1 // pred_check
      _
    $region3: #{_lambda_.1} parent=1 // pred_check_branch
      %15 = sbr.rel (0) target = $region5
    $region4: #{_lambda_.1} parent=1 // pred_region
      _
    $region5: #{_lambda_.1} parent=1 // pred_fallthru
      _
    // Predicated region
    $region6: #{_lambda_.1} parent=1 // pred_check
      _
    $region7: #{_lambda_.1} parent=1 // pred_check_branch
      %17 = sbr.rel (0) target = $region9
    $region8: #{_lambda_.1} parent=1 // pred_region
      _
    $region9: #{_lambda_.1} parent=1 // pred_fallthru
      _
    // Predicated region
    $region10: #{_lambda_.1} parent=1 // pred_check
      _
    $region11: #{_lambda_.1} parent=1 // pred_check_branch
      %19 = sbr.rel (0) target = $region13
    $region12: #{_lambda_.1} parent=1 // pred_region
      _
    $region13: #{_lambda_.1} parent=1 // pred_fallthru
      _
    // Predicated region
    $region14: #{_lambda_.1} parent=1 // pred_check
      _
    $region15: #{_lambda_.1} parent=1 // pred_check_branch
      %21 = sbr.rel (0) target = $region17
    $region16: #{_lambda_.1} parent=1 // pred_region
      %23 = vsyncadd [#allocation3], 0
      %s24 = sshll.u32 %s3, 4
      %s25 = int_to_ptr.hbm [resolvable:$true] %s24
      %s26 = sshll.u32 [#allocation2], 4
      %s27 = int_to_ptr.vmem [resolvable:$true] %s26
      %32 = dma.hbm_to_vmem [thread:$0]  %s25, 4096, %s27, [#allocation3], 128, 128, 8
    $region17: #{_lambda_.1} parent=1 // pred_fallthru
      _
    // Predicated region
    $region18: #{_lambda_.1} parent=1 // pred_check
      _
    $region19: #{_lambda_.1} parent=1 // pred_check_branch
      %34 = sbr.rel (0) target = $region21
    $region20: #{_lambda_.1} parent=1 // pred_region
      _
    $region21: #{_lambda_.1} parent=1 // pred_fallthru
      _
    // Predicated region
    $region22: #{_lambda_.1} parent=1 // pred_check
      _
    $region23: #{_lambda_.1} parent=1 // pred_check_branch
      %36 = sbr.rel (0) target = $region25
    $region24: #{_lambda_.1} parent=1 // pred_region
      %38 = vsyncadd [#allocation5], 0
      %s39 = sshll.u32 %s5, 4
      %s40 = int_to_ptr.hbm [resolvable:$true] %s39
      %s41 = sshll.u32 [#allocation4], 4
      %s42 = int_to_ptr.vmem [resolvable:$true] %s41
      %47 = dma.hbm_to_vmem [thread:$0]  %s40, 2048, %s42, [#allocation5], 64, 64, 4
    $region25: #{_lambda_.1} parent=1 // pred_fallthru
      _
    // Predicated region
    $region26: #{_lambda_.1} parent=1 // pred_check
      _
    $region27: #{_lambda_.1} parent=1 // pred_check_branch
      %49 = sbr.rel (0) target = $region29
    $region28: #{_lambda_.1} parent=1 // pred_region
      _
    $region29: #{_lambda_.1} parent=1 // pred_fallthru
      _
    // Predicated region
    $region30: #{_lambda_.1} parent=1 // pred_check
      _
    $region31: #{_lambda_.1} parent=1 // pred_check_branch
      %51 = sbr.rel (0) target = $region33
    $region32: #{_lambda_.1} parent=1 // pred_region
      %53 = dma.done [#allocation3], 4096
    $region33: #{_lambda_.1} parent=1 // pred_fallthru
      _
    // Predicated region
    $region34: #{_lambda_.1} parent=1 // pred_check
      _
    $region35: #{_lambda_.1} parent=1 // pred_check_branch
      %55 = sbr.rel (0) target = $region37
    $region36: #{_lambda_.1} parent=1 // pred_region
      %57 = dma.done [#allocation5], 2048
    $region37: #{_lambda_.1} parent=1 // pred_fallthru
      _
    %v59 = vld [vmem:[%s0] sm:$0xf]
    %v60 = vld [vmem:[%s1] sm:$0xff]
    %v62 = vunpack.c.l.b16 %v60
    %v63 = vunpack.c.h.b16 %v60
    %v64 = vpack.c.b16 %v62, %v62
    %v65 = vpack.c.b16 %v63, %v63
    %vm66 = vcmask 64512
    %v68 = vsel %vm66, %v59, 0
    %vm70 = vcmask 1043456
    %v72 = vsel %vm70, %v64, 0
    %v75 = vsel %vm70, %v65, 0
    %77 = vmatpush.bf16.msra.mxu0 0
    %78 = vmatpush.bf16.msra.mxu0 0
    %79 = vmatpush.bf16.msra.mxu0 0
    %80 = vmatpush.bf16.msra.mxu0 0
    %81 = vmatpush.bf16.msra.mxu0 0
    %82 = vmatpush.bf16.msra.mxu0 0
    %83 = vmatpush.bf16.msra.mxu0 0
    %84 = vmatpush.bf16.msra.mxu0 %v72
    %85 = vmatmul.bf16.gmra.mxu0 %v68
    %v86 = vpop.f32.mrf.mxu0
    %v87 = vadd.f32 0.0, %v86
    %v88 = vpop.f32.mrf.mxu0
    %89 = vdwg.mxu0
    %90 = vmatpush.bf16.msra.mxu0 0
    %91 = vmatpush.bf16.msra.mxu0 0
    %92 = vmatpush.bf16.msra.mxu0 0
    %93 = vmatpush.bf16.msra.mxu0 0
    %94 = vmatpush.bf16.msra.mxu0 0
    %95 = vmatpush.bf16.msra.mxu0 0
    %96 = vmatpush.bf16.msra.mxu0 0
    %97 = vmatpush.bf16.msra.mxu0 %v75
    %98 = vmatmul.bf16.gmra.mxu0 %v68
    %v99 = vpop.f32.mrf.mxu0
    %v100 = vadd.f32 0.0, %v99
    %v101 = vpop.f32.mrf.mxu0
    %102 = vdwg.mxu0
    %v103 = vpack.c.bf16 %v100, %v87
    %v104 = vld [vmem:[%s2] sm:$0x3]
    %106 = vst [vmem:[#allocation1] ss:$9 sm:$0xff] %v104
    %v107 = vld [vmem:[#allocation1] sm:$0xff]
    %v108 = vld [vmem:[#allocation1 + $0x9] sm:$0xff]
    %v109 = vpack.i.b16 %v107, %v107
    %v111 = vperm.slane %v109, 0
    %v112 = vpack.i.b16 %v108, %v108
    %v114 = vperm.slane %v112, 0
    %v115 = vunpack.c.l.bf16 %v103
    %v116 = vunpack.c.h.bf16 %v103
    %v117 = vunpack.c.l.bf16 %v111
    %v118 = vunpack.c.l.bf16 %v114
    %v119 = vadd.f32 %v115, %v117
    %v120 = vadd.f32 %v116, %v118
    %v121 = vpack.c.bf16 %v120, %v119
    %v122 = vunpack.c.l.bf16 %v121
    %v123 = vunpack.c.h.bf16 %v121
    %v124 = vmax.f32 %v122, 0.0
    %v125 = vmax.f32 %v123, 0.0
    %v126 = vpack.c.bf16 %v124, %v124
    %v127 = vpack.c.bf16 %v125, %v125
    %v128 = vld [vmem:[#allocation2] sm:$0xff]
    %v129 = vld [vmem:[#allocation2 + $0x8] sm:$0xff]
    %v130 = vld [vmem:[#allocation2 + $0x10] sm:$0xff]
    %v131 = vld [vmem:[#allocation2 + $0x18] sm:$0xff]
    %v132 = vld [vmem:[#allocation2 + $0x20] sm:$0xff]
    %v133 = vld [vmem:[#allocation2 + $0x28] sm:$0xff]
    %v134 = vld [vmem:[#allocation2 + $0x30] sm:$0xff]
    %v135 = vld [vmem:[#allocation2 + $0x38] sm:$0xff]
    %v136 = vld [vmem:[#allocation2 + $0x40] sm:$0xff]
    %v137 = vld [vmem:[#allocation2 + $0x48] sm:$0xff]
    %v138 = vld [vmem:[#allocation2 + $0x50] sm:$0xff]
    %v139 = vld [vmem:[#allocation2 + $0x58] sm:$0xff]
    %v140 = vld [vmem:[#allocation2 + $0x60] sm:$0xff]
    %v141 = vld [vmem:[#allocation2 + $0x68] sm:$0xff]
    %v142 = vld [vmem:[#allocation2 + $0x70] sm:$0xff]
    %v143 = vld [vmem:[#allocation2 + $0x78] sm:$0xff]
    %v144 = vld [vmem:[#allocation2 + $0x80] sm:$0xff]
    %v145 = vld [vmem:[#allocation2 + $0x88] sm:$0xff]
    %v146 = vld [vmem:[#allocation2 + $0x90] sm:$0xff]
    %v147 = vld [vmem:[#allocation2 + $0x98] sm:$0xff]
    %v148 = vld [vmem:[#allocation2 + $0xa0] sm:$0xff]
    %v149 = vld [vmem:[#allocation2 + $0xa8] sm:$0xff]
    %v150 = vld [vmem:[#allocation2 + $0xb0] sm:$0xff]
    %v151 = vld [vmem:[#allocation2 + $0xb8] sm:$0xff]
    %v152 = vld [vmem:[#allocation2 + $0xc0] sm:$0xff]
    %v153 = vld [vmem:[#allocation2 + $0xc8] sm:$0xff]
    %v154 = vld [vmem:[#allocation2 + $0xd0] sm:$0xff]
    %v155 = vld [vmem:[#allocation2 + $0xd8] sm:$0xff]
    %v156 = vld [vmem:[#allocation2 + $0xe0] sm:$0xff]
    %v157 = vld [vmem:[#allocation2 + $0xe8] sm:$0xff]
    %v158 = vld [vmem:[#allocation2 + $0xf0] sm:$0xff]
    %v159 = vld [vmem:[#allocation2 + $0xf8] sm:$0xff]
    %v192 = vunpack.c.l.b16 %v128
    %v193 = vunpack.c.h.b16 %v128
    %v194 = vunpack.c.l.b16 %v129
    %v195 = vunpack.c.h.b16 %v129
    %v196 = vunpack.c.l.b16 %v130
    %v197 = vunpack.c.h.b16 %v130
    %v198 = vunpack.c.l.b16 %v131
    %v199 = vunpack.c.h.b16 %v131
    %v200 = vunpack.c.l.b16 %v132
    %v201 = vunpack.c.h.b16 %v132
    %v202 = vunpack.c.l.b16 %v133
    %v203 = vunpack.c.h.b16 %v133
    %v204 = vunpack.c.l.b16 %v134
    %v205 = vunpack.c.h.b16 %v134
    %v206 = vunpack.c.l.b16 %v135
    %v207 = vunpack.c.h.b16 %v135
    %v208 = vunpack.c.l.b16 %v136
    %v209 = vunpack.c.h.b16 %v136
    %v210 = vunpack.c.l.b16 %v137
    %v211 = vunpack.c.h.b16 %v137
    %v212 = vunpack.c.l.b16 %v138
    %v213 = vunpack.c.h.b16 %v138
    %v214 = vunpack.c.l.b16 %v139
    %v215 = vunpack.c.h.b16 %v139
    %v216 = vunpack.c.l.b16 %v140
    %v217 = vunpack.c.h.b16 %v140
    %v218 = vunpack.c.l.b16 %v141
    %v219 = vunpack.c.h.b16 %v141
    %v220 = vunpack.c.l.b16 %v142
    %v221 = vunpack.c.h.b16 %v142
    %v222 = vunpack.c.l.b16 %v143
    %v223 = vunpack.c.h.b16 %v143
    %v224 = vunpack.c.l.b16 %v144
    %v225 = vunpack.c.h.b16 %v144
    %v226 = vunpack.c.l.b16 %v145
    %v227 = vunpack.c.h.b16 %v145
    %v228 = vunpack.c.l.b16 %v146
    %v229 = vunpack.c.h.b16 %v146
    %v230 = vunpack.c.l.b16 %v147
    %v231 = vunpack.c.h.b16 %v147
    %v232 = vunpack.c.l.b16 %v148
    %v233 = vunpack.c.h.b16 %v148
    %v234 = vunpack.c.l.b16 %v149
    %v235 = vunpack.c.h.b16 %v149
    %v236 = vunpack.c.l.b16 %v150
    %v237 = vunpack.c.h.b16 %v150
    %v238 = vunpack.c.l.b16 %v151
    %v239 = vunpack.c.h.b16 %v151
    %v240 = vunpack.c.l.b16 %v152
    %v241 = vunpack.c.h.b16 %v152
    %v242 = vunpack.c.l.b16 %v153
    %v243 = vunpack.c.h.b16 %v153
    %v244 = vunpack.c.l.b16 %v154
    %v245 = vunpack.c.h.b16 %v154
    %v246 = vunpack.c.l.b16 %v155
    %v247 = vunpack.c.h.b16 %v155
    %v248 = vunpack.c.l.b16 %v156
    %v249 = vunpack.c.h.b16 %v156
    %v250 = vunpack.c.l.b16 %v157
    %v251 = vunpack.c.h.b16 %v157
    %v252 = vunpack.c.l.b16 %v158
    %v253 = vunpack.c.h.b16 %v158
    %v254 = vunpack.c.l.b16 %v159
    %v255 = vunpack.c.h.b16 %v159
    %v256 = vpack.c.b16 %v194, %v192
    %v257 = vpack.c.b16 %v195, %v193
    %v258 = vpack.c.b16 %v198, %v196
    %v259 = vpack.c.b16 %v199, %v197
    %v260 = vpack.c.b16 %v202, %v200
    %v261 = vpack.c.b16 %v203, %v201
    %v262 = vpack.c.b16 %v206, %v204
    %v263 = vpack.c.b16 %v207, %v205
    %v264 = vpack.c.b16 %v210, %v208
    %v265 = vpack.c.b16 %v211, %v209
    %v266 = vpack.c.b16 %v214, %v212
    %v267 = vpack.c.b16 %v215, %v213
    %v268 = vpack.c.b16 %v218, %v216
    %v269 = vpack.c.b16 %v219, %v217
    %v270 = vpack.c.b16 %v222, %v220
    %v271 = vpack.c.b16 %v223, %v221
    %v272 = vpack.c.b16 %v226, %v224
    %v273 = vpack.c.b16 %v227, %v225
    %v274 = vpack.c.b16 %v230, %v228
    %v275 = vpack.c.b16 %v231, %v229
    %v276 = vpack.c.b16 %v234, %v232
    %v277 = vpack.c.b16 %v235, %v233
    %v278 = vpack.c.b16 %v238, %v236
    %v279 = vpack.c.b16 %v239, %v237
    %v280 = vpack.c.b16 %v242, %v240
    %v281 = vpack.c.b16 %v243, %v241
    %v282 = vpack.c.b16 %v246, %v244
    %v283 = vpack.c.b16 %v247, %v245
    %v284 = vpack.c.b16 %v250, %v248
    %v285 = vpack.c.b16 %v251, %v249
    %v286 = vpack.c.b16 %v254, %v252
    %v287 = vpack.c.b16 %v255, %v253
    %320 = vmatpush.bf16.msra.mxu0 %v270
    %321 = vmatpush.bf16.msra.mxu0 %v268
    %322 = vmatpush.bf16.msra.mxu0 %v266
    %323 = vmatpush.bf16.msra.mxu0 %v264
    %324 = vmatpush.bf16.msra.mxu0 %v262
    %325 = vmatpush.bf16.msra.mxu0 %v260
    %326 = vmatpush.bf16.msra.mxu0 %v258
    %327 = vmatpush.bf16.msra.mxu0 %v256
    %328 = vmatmul.bf16.gmra.mxu0 %v126
    %v329 = vpop.f32.mrf.mxu0
    %v330 = vadd.f32 0.0, %v329
    %v331 = vpop.f32.mrf.mxu0
    %332 = vdwg.mxu0
    %333 = vmatpush.bf16.msra.mxu0 %v286
    %334 = vmatpush.bf16.msra.mxu0 %v284
    %335 = vmatpush.bf16.msra.mxu0 %v282
    %336 = vmatpush.bf16.msra.mxu0 %v280
    %337 = vmatpush.bf16.msra.mxu0 %v278
    %338 = vmatpush.bf16.msra.mxu0 %v276
    %339 = vmatpush.bf16.msra.mxu0 %v274
    %340 = vmatpush.bf16.msra.mxu0 %v272
    %341 = vmatmul.bf16.gmra.mxu0 %v127
    %v342 = vpop.f32.mrf.mxu0
    %v343 = vadd.f32 %v330, %v342
    %v344 = vpop.f32.mrf.mxu0
    %345 = vdwg.mxu0
    %346 = vmatpush.bf16.msra.mxu0 %v271
    %347 = vmatpush.bf16.msra.mxu0 %v269
    %348 = vmatpush.bf16.msra.mxu0 %v267
    %349 = vmatpush.bf16.msra.mxu0 %v265
    %350 = vmatpush.bf16.msra.mxu0 %v263
    %351 = vmatpush.bf16.msra.mxu0 %v261
    %352 = vmatpush.bf16.msra.mxu0 %v259
    %353 = vmatpush.bf16.msra.mxu0 %v257
    %354 = vmatmul.bf16.gmra.mxu0 %v126
    %v355 = vpop.f32.mrf.mxu0
    %v356 = vadd.f32 0.0, %v355
    %v357 = vpop.f32.mrf.mxu0
    %358 = vdwg.mxu0
    %359 = vmatpush.bf16.msra.mxu0 %v287
    %360 = vmatpush.bf16.msra.mxu0 %v285
    %361 = vmatpush.bf16.msra.mxu0 %v283
    %362 = vmatpush.bf16.msra.mxu0 %v281
    %363 = vmatpush.bf16.msra.mxu0 %v279
    %364 = vmatpush.bf16.msra.mxu0 %v277
    %365 = vmatpush.bf16.msra.mxu0 %v275
    %366 = vmatpush.bf16.msra.mxu0 %v273
    %367 = vmatmul.bf16.gmra.mxu0 %v127
    %v368 = vpop.f32.mrf.mxu0
    %v369 = vadd.f32 %v356, %v368
    %v370 = vpop.f32.mrf.mxu0
    %371 = vdwg.mxu0
    %v372 = vpack.c.bf16 %v369, %v343
    %v373 = vld [vmem:[%s4] sm:$0x3]
    %375 = vst [vmem:[#allocation1] ss:$9 sm:$0xff] %v373
    %v376 = vld [vmem:[#allocation1] sm:$0xff]
    %v377 = vld [vmem:[#allocation1 + $0x9] sm:$0xff]
    %v378 = vpack.i.b16 %v376, %v376
    %v380 = vperm.slane %v378, 0
    %v381 = vpack.i.b16 %v377, %v377
    %v383 = vperm.slane %v381, 0
    %v384 = vunpack.c.l.bf16 %v372
    %v385 = vunpack.c.h.bf16 %v372
    %v386 = vunpack.c.l.bf16 %v380
    %v387 = vunpack.c.l.bf16 %v383
    %v388 = vadd.f32 %v384, %v386
    %v389 = vadd.f32 %v385, %v387
    %v390 = vpack.c.bf16 %v389, %v388
    %v391 = vunpack.c.l.bf16 %v390
    %v392 = vunpack.c.h.bf16 %v390
    %v393 = vmax.f32 %v391, 0.0
    %v394 = vmax.f32 %v392, 0.0
    %v395 = vpack.c.bf16 %v393, %v393
    %v396 = vpack.c.bf16 %v394, %v394
    %v397 = vld [vmem:[#allocation4] sm:$0xf]
    %v398 = vld [vmem:[#allocation4 + $0x4] sm:$0xf]
    %v399 = vld [vmem:[#allocation4 + $0x8] sm:$0xf]
    %v400 = vld [vmem:[#allocation4 + $0xc] sm:$0xf]
    %v401 = vld [vmem:[#allocation4 + $0x10] sm:$0xf]
    %v402 = vld [vmem:[#allocation4 + $0x14] sm:$0xf]
    %v403 = vld [vmem:[#allocation4 + $0x18] sm:$0xf]
    %v404 = vld [vmem:[#allocation4 + $0x1c] sm:$0xf]
    %v405 = vld [vmem:[#allocation4 + $0x20] sm:$0xf]
    %v406 = vld [vmem:[#allocation4 + $0x24] sm:$0xf]
    %v407 = vld [vmem:[#allocation4 + $0x28] sm:$0xf]
    %v408 = vld [vmem:[#allocation4 + $0x2c] sm:$0xf]
    %v409 = vld [vmem:[#allocation4 + $0x30] sm:$0xf]
    %v410 = vld [vmem:[#allocation4 + $0x34] sm:$0xf]
    %v411 = vld [vmem:[#allocation4 + $0x38] sm:$0xf]
    %v412 = vld [vmem:[#allocation4 + $0x3c] sm:$0xf]
    %v413 = vld [vmem:[#allocation4 + $0x40] sm:$0xf]
    %v414 = vld [vmem:[#allocation4 + $0x44] sm:$0xf]
    %v415 = vld [vmem:[#allocation4 + $0x48] sm:$0xf]
    %v416 = vld [vmem:[#allocation4 + $0x4c] sm:$0xf]
    %v417 = vld [vmem:[#allocation4 + $0x50] sm:$0xf]
    %v418 = vld [vmem:[#allocation4 + $0x54] sm:$0xf]
    %v419 = vld [vmem:[#allocation4 + $0x58] sm:$0xf]
    %v420 = vld [vmem:[#allocation4 + $0x5c] sm:$0xf]
    %v421 = vld [vmem:[#allocation4 + $0x60] sm:$0xf]
    %v422 = vld [vmem:[#allocation4 + $0x64] sm:$0xf]
    %v423 = vld [vmem:[#allocation4 + $0x68] sm:$0xf]
    %v424 = vld [vmem:[#allocation4 + $0x6c] sm:$0xf]
    %v425 = vld [vmem:[#allocation4 + $0x70] sm:$0xf]
    %v426 = vld [vmem:[#allocation4 + $0x74] sm:$0xf]
    %v427 = vld [vmem:[#allocation4 + $0x78] sm:$0xf]
    %v428 = vld [vmem:[#allocation4 + $0x7c] sm:$0xf]
    %v429 = vld [vmem:[%s6] sm:$0x1]
    %v431 = vperm.slane %v429, 0
    %v465 = vunpack.c.l.b16 %v397
    %v466 = vunpack.c.l.b16 %v398
    %v467 = vunpack.c.l.b16 %v399
    %v468 = vunpack.c.l.b16 %v400
    %v469 = vunpack.c.l.b16 %v401
    %v470 = vunpack.c.l.b16 %v402
    %v471 = vunpack.c.l.b16 %v403
    %v472 = vunpack.c.l.b16 %v404
    %v473 = vunpack.c.l.b16 %v405
    %v474 = vunpack.c.l.b16 %v406
    %v475 = vunpack.c.l.b16 %v407
    %v476 = vunpack.c.l.b16 %v408
    %v477 = vunpack.c.l.b16 %v409
    %v478 = vunpack.c.l.b16 %v410
    %v479 = vunpack.c.l.b16 %v411
    %v480 = vunpack.c.l.b16 %v412
    %v481 = vunpack.c.l.b16 %v413
    %v482 = vunpack.c.l.b16 %v414
    %v483 = vunpack.c.l.b16 %v415
    %v484 = vunpack.c.l.b16 %v416
    %v485 = vunpack.c.l.b16 %v417
    %v486 = vunpack.c.l.b16 %v418
    %v487 = vunpack.c.l.b16 %v419
    %v488 = vunpack.c.l.b16 %v420
    %v489 = vunpack.c.l.b16 %v421
    %v490 = vunpack.c.l.b16 %v422
    %v491 = vunpack.c.l.b16 %v423
    %v492 = vunpack.c.l.b16 %v424
    %v493 = vunpack.c.l.b16 %v425
    %v494 = vunpack.c.l.b16 %v426
    %v495 = vunpack.c.l.b16 %v427
    %v496 = vunpack.c.l.b16 %v428
    %v497 = vpack.c.b16 %v466, %v465
    %v498 = vpack.c.b16 %v468, %v467
    %v499 = vpack.c.b16 %v470, %v469
    %v500 = vpack.c.b16 %v472, %v471
    %v501 = vpack.c.b16 %v474, %v473
    %v502 = vpack.c.b16 %v476, %v475
    %v503 = vpack.c.b16 %v478, %v477
    %v504 = vpack.c.b16 %v480, %v479
    %v505 = vpack.c.b16 %v482, %v481
    %v506 = vpack.c.b16 %v484, %v483
    %v507 = vpack.c.b16 %v486, %v485
    %v508 = vpack.c.b16 %v488, %v487
    %v509 = vpack.c.b16 %v490, %v489
    %v510 = vpack.c.b16 %v492, %v491
    %v511 = vpack.c.b16 %v494, %v493
    %v512 = vpack.c.b16 %v496, %v495
    %529 = vmatpush.bf16.msra.mxu0 %v504
    %530 = vmatpush.bf16.msra.mxu0 %v503
    %531 = vmatpush.bf16.msra.mxu0 %v502
    %532 = vmatpush.bf16.msra.mxu0 %v501
    %533 = vmatpush.bf16.msra.mxu0 %v500
    %534 = vmatpush.bf16.msra.mxu0 %v499
    %535 = vmatpush.bf16.msra.mxu0 %v498
    %536 = vmatpush.bf16.msra.mxu0 %v497
    %537 = vmatmul.bf16.gmra.mxu0 %v395
    %v538 = vpop.f32.mrf.mxu0
    %v539 = vadd.f32 %v431, %v538
    %v540 = vpop.f32.mrf.mxu0
    %541 = vdwg.mxu0
    %542 = vmatpush.bf16.msra.mxu0 %v512
    %543 = vmatpush.bf16.msra.mxu0 %v511
    %544 = vmatpush.bf16.msra.mxu0 %v510
    %545 = vmatpush.bf16.msra.mxu0 %v509
    %546 = vmatpush.bf16.msra.mxu0 %v508
    %547 = vmatpush.bf16.msra.mxu0 %v507
    %548 = vmatpush.bf16.msra.mxu0 %v506
    %549 = vmatpush.bf16.msra.mxu0 %v505
    %550 = vmatmul.bf16.gmra.mxu0 %v396
    %v551 = vpop.f32.mrf.mxu0
    %v552 = vadd.f32 %v539, %v551
    %v553 = vpop.f32.mrf.mxu0
    %554 = vdwg.mxu0
    %555 = vmax.xlane.f32.xlu0 %v552
    %v556 = vpop.xlane.xlu0 %555
    %v557 = vsub.f32 %v552, %v556
    %v558 = vmul.f32 %v557, 1.442695
    %v559 = vpow.pop %v558
    %560 = vadd.xlane.f32.xlu0 %v559
    %v561 = vpop.xlane.xlu0 %560
    %v562 = vrcp.pop %v561
    %v563 = vmul.f32 %v561, %v562
    %v564 = vsub.f32 1.0, %v563
    %v565 = vmul.f32 %v562, %v564
    %v566 = vadd.f32 %v562, %v565
    %vm567 = vweird.f32 %v561
    %vm568 = vweird.f32 %v562
    %vm569 = vmor %vm567, %vm568
    %v570 = vsel %vm569, %v562, %v566
    %v571 = vand.u32 2147483647, %v561
    %vm572 = vcmp.eq.f32.partialorder %v571, 8.507059e+37
    %v573 = vand.u32 %v561, 2147483648
    %v574 = vor.u32 1.1754944e-38, %v573
    %v575 = vsel %vm572, %v574, %v570
    %v576 = vmul.f32 %v559, %v575
    %v577 = vpack.c.bf16 %v576, %v576
    %578 = vst [vmem:[%s7] sm:$0xf] %v577
    // Predicated region
    $region38: #{_lambda_.1} parent=1 // pred_check
      _
    $region39: #{_lambda_.1} parent=1 // pred_check_branch
      %580 = sbr.rel (0) target = $region41
    $region40: #{_lambda_.1} parent=1 // pred_region
      _
    $region41: #{_lambda_.1} parent=1 // pred_fallthru
      _
    // Predicated region
    $region42: #{_lambda_.1} parent=1 // pred_check
      _
    $region43: #{_lambda_.1} parent=1 // pred_check_branch
      %582 = sbr.rel (0) target = $region45
    $region44: #{_lambda_.1} parent=1 // pred_region
      _
    $region45: #{_lambda_.1} parent=1 // pred_fallthru
      _
    %583 = vsyncpa [#allocation3], 1
    %584 = vsyncpa [#allocation5], 1

</llo_original>
